<compile_context>
chip_gen: v7x
topology: tpu7x:2x2x1
jax: 0.10.0
libtpu: 0.0.40
codegen_flags: <defaults>
</compile_context>

<pallas_src>
import functools

import jax
import jax.numpy as jnp
from jax.experimental import pallas as pl
from jax.experimental.pallas import tpu as pltpu

_MIB = 1024 * 1024


def _vmem_budgets():
    """Per-generation scoped-VMEM limit and double-buffered-input budget."""
    try:
        phys = int(pltpu.get_tpu_info().vmem_capacity_bytes)
    except Exception:  # be robust if the trace-time query is unavailable
        phys = 64 * _MIB  # conservative (v7x-sized) fallback
    # ~3/4 of physical, capped at 64 MiB: 64 MiB on v5e/v6e (128 MiB VMEM),
    # 48 MiB on v7x (64 MiB VMEM). Always above the 16/32 MiB scoped defaults.
    vmem_limit = min(phys * 3 // 4, 64 * _MIB)
    # Headroom for the per-tile output blocks, semaphores and internal scratch.
    input_budget = max(vmem_limit - 6 * _MIB, 8 * _MIB)
    return int(vmem_limit), int(input_budget)


def _choose_tile_rows(num_rows, width, itemsize, input_budget_bytes, max_rows=8192):
    """Largest batch tile (rows) whose 3 double-buffered inputs fit the VMEM budget."""
    bytes_per_row = 3 * 2 * width * itemsize  # 3 inputs x 2 pipeline buffers
    tb = max(1, input_budget_bytes // bytes_per_row)
    tb = min(tb, max_rows, num_rows)
    align = 8 if itemsize >= 4 else 16  # sublane tiling (16 for packed 2-byte dtypes)
    if tb >= align:
        tb = (tb // align) * align
    else:
        # Tiny batch: a full-extent block is always legal; otherwise use one aligned tile.
        tb = align if num_rows >= align else num_rows
    return int(tb)


def _mytryoshka_kernel(a_ref, p_ref, n_ref, o_ref, *,
                       margin, batch, tile_rows, group, dim, need_mask):
    i = pl.program_id(0)

    # Promote to f32 regardless of input dtype (bf16 inputs halve HBM traffic).
    a = a_ref[...].astype(jnp.float32)
    p = p_ref[...].astype(jnp.float32)
    n = n_ref[...].astype(jnp.float32)

    sq_pos = (a - p) * (a - p)
    sq_neg = (a - n) * (a - n)

    if need_mask:
        row = jax.lax.broadcasted_iota(jnp.int32, (tile_rows, 1), 0)
        base = (i * tile_rows + row) * group  # global original-row id of lane-group 0

    # Each packed row holds `group` original samples in contiguous lane groups of `dim`.
    hinge = jnp.zeros((tile_rows, 1), jnp.float32)
    for g in range(group):
        lo, hi = g * dim, (g + 1) * dim
        pos_ss = jnp.sum(sq_pos[:, lo:hi], axis=1, keepdims=True)
        neg_ss = jnp.sum(sq_neg[:, lo:hi], axis=1, keepdims=True)
        # MarginRankingLoss(pos, neg, y=1): max(0, -(pos - neg) + margin)
        h = jnp.maximum(jnp.sqrt(neg_ss) - jnp.sqrt(pos_ss) + margin, 0.0)
        if need_mask:
            # Mask grid-padding rows BEFORE accumulation so garbage/NaN cannot leak.
            h = jnp.where(base + g < batch, h, 0.0)
        hinge = hinge + h

    # One partial sum per tile, written to this tile's own output block (megacore-safe).
    partial = jnp.sum(hinge)
    o_ref[...] = jnp.full(o_ref.shape, partial, dtype=jnp.float32)


def mytryoshka_loss(anchor, positive, negative, margin=1.0):
    B, D = anchor.shape
    itemsize = jnp.dtype(anchor.dtype).itemsize

    # Lane packing: for small D, pack G = 128 // D samples per 128-lane row so DMA,
    # VMEM and vregs are fully dense (row-major reshape is free in XLA).
    if 8 <= D < 128 and 128 % D == 0 and B % (128 // D) == 0:
        G = 128 // D
    else:
        G = 1
    # TODO(synk): when D < 8 or B % G != 0, a padded pack would add an extra HBM copy;
    #             we fall back to the unpacked layout instead.
    rows, width = B // G, G * D
    if G > 1:
        anchor = anchor.reshape(rows, width)
        positive = positive.reshape(rows, width)
        negative = negative.reshape(rows, width)

    vmem_limit, input_budget = _vmem_budgets()
    TB = _choose_tile_rows(rows, width, itemsize, input_budget)
    num_tiles = int(pl.cdiv(rows, TB))
    need_mask = (num_tiles * TB * G) != B  # any padded rows at the tail?

    kernel = functools.partial(
        _mytryoshka_kernel, margin=float(margin), batch=B,
        tile_rows=TB, group=G, dim=D, need_mask=need_mask)

    cost = pl.CostEstimate(
        flops=8 * B * D,
        transcendentals=2 * B,
        bytes_accessed=3 * B * D * itemsize + num_tiles * 8 * 128 * 4)

    in_spec = pl.BlockSpec((TB, width), lambda i: (i, 0))
    partials = pl.pallas_call(
        kernel,
        out_shape=jax.ShapeDtypeStruct((num_tiles, 8, 128), jnp.float32),
        grid=(num_tiles,),
        in_specs=[in_spec, in_spec, in_spec],
        out_specs=pl.BlockSpec((1, 8, 128), lambda i: (i, 0, 0)),
        compiler_params=pltpu.CompilerParams(
            dimension_semantics=("parallel",),  # no carried state -> v7x megacore OK
            vmem_limit_bytes=vmem_limit),
        cost_estimate=cost,
    )(anchor, positive, negative)

    # Tiny final reduction + compile-time 1/B scale in plain JAX.
    return jnp.sum(partials[:, 0, 0]) * jnp.float32(1.0 / B)


if __name__ == "__main__":
    key = jax.random.PRNGKey(0)
    k = jax.random.split(key, 6)

    def ref_loss(a, p, n, margin):
        pos_d = jnp.linalg.norm(a - p, axis=1)
        neg_d = jnp.linalg.norm(a - n, axis=1)
        return jnp.mean(jnp.maximum(neg_d - pos_d + margin, 0.0))

    # Case 1: small D -> lane-packing path (G=4), 12 packed rows -> tiles of 8 rows,
    # last tile partially out of range -> masked padding path exercised.
    B1, D1 = 48, 32
    a1 = jax.random.normal(k[0], (B1, D1), dtype=jnp.float32)
    p1 = jax.random.normal(k[1], (B1, D1), dtype=jnp.float32)
    n1 = jax.random.normal(k[2], (B1, D1), dtype=jnp.float32)
    loss1 = mytryoshka_loss(a1, p1, n1, margin=1.0)
    jax.block_until_ready(loss1)
    assert jnp.allclose(loss1, ref_loss(a1, p1, n1, 1.0), atol=1e-5, rtol=1e-5), (
        loss1, ref_loss(a1, p1, n1, 1.0))

    # Case 2: D not a divisor of 128 -> unpacked path, partial last tile masked.
    B2, D2 = 10, 160
    a2 = jax.random.normal(k[3], (B2, D2), dtype=jnp.float32)
    p2 = jax.random.normal(k[4], (B2, D2), dtype=jnp.float32)
    n2 = jax.random.normal(k[5], (B2, D2), dtype=jnp.float32)
    loss2 = mytryoshka_loss(a2, p2, n2, margin=1.0)
    jax.block_until_ready(loss2)
    assert jnp.allclose(loss2, ref_loss(a2, p2, n2, 1.0), atol=1e-5, rtol=1e-5), (
        loss2, ref_loss(a2, p2, n2, 1.0))

    print("KERNEL_OK")
</pallas_src>

<mosaic_0001>
module attributes {stable_mosaic.version = 11 : i64} {
  func.func @_mytryoshka_kernel(%arg0: i32, %arg1: memref<8x128xf32, #tpu.memory_space<vmem>>, %arg2: memref<8x128xf32, #tpu.memory_space<vmem>>, %arg3: memref<8x128xf32, #tpu.memory_space<vmem>>, %arg4: memref<1x8x128xf32, #tpu.memory_space<vmem>>) attributes {dimension_semantics = [#tpu.dimension_semantics<parallel>], iteration_bounds = array<i64: 2>, scalar_prefetch = 0 : i64, scratch_operands = 0 : i64, tpu.core_type = #tpu.core_type<tc>, window_params = [{transform_indices = @transform_0, window_bounds = array<i64: 8, 128>}, {transform_indices = @transform_1, window_bounds = array<i64: 8, 128>}, {transform_indices = @transform_2, window_bounds = array<i64: 8, 128>}, {transform_indices = @transform_3, window_bounds = array<i64: 1, 8, 128>}]} {
    %c0 = arith.constant 0 : index
    %c0_0 = arith.constant 0 : index
    %0 = vector.load %arg1[%c0, %c0_0] : memref<8x128xf32, #tpu.memory_space<vmem>>, vector<8x128xf32>
    %c0_1 = arith.constant 0 : index
    %c0_2 = arith.constant 0 : index
    %1 = vector.load %arg2[%c0_1, %c0_2] : memref<8x128xf32, #tpu.memory_space<vmem>>, vector<8x128xf32>
    %c0_3 = arith.constant 0 : index
    %c0_4 = arith.constant 0 : index
    %2 = vector.load %arg3[%c0_3, %c0_4] : memref<8x128xf32, #tpu.memory_space<vmem>>, vector<8x128xf32>
    %3 = arith.subf %0, %1 : vector<8x128xf32>
    %4 = arith.subf %0, %1 : vector<8x128xf32>
    %5 = arith.mulf %3, %4 : vector<8x128xf32>
    %6 = arith.subf %0, %2 : vector<8x128xf32>
    %7 = arith.subf %0, %2 : vector<8x128xf32>
    %8 = arith.mulf %6, %7 : vector<8x128xf32>
    %9 = tpu.iota {dimensions = array<i32: 0>} : vector<8x1xi32>
    %c8_i32 = arith.constant 8 : i32
    %10 = arith.muli %arg0, %c8_i32 : i32
    %11 = vector.broadcast %10 : i32 to vector<8x1xi32>
    %12 = arith.addi %11, %9 : vector<8x1xi32>
    %c4_i32 = arith.constant 4 : i32
    %13 = vector.broadcast %c4_i32 : i32 to vector<8x1xi32>
    %14 = arith.muli %12, %13 : vector<8x1xi32>
    %cst = arith.constant 0.000000e+00 : f32
    %15 = vector.broadcast %cst : f32 to vector<8x1xf32>
    %16 = vector.extract_strided_slice %5 {offsets = [0, 0], sizes = [8, 32], strides = [1, 1]} : vector<8x128xf32> to vector<8x32xf32>
    %cst_5 = arith.constant dense<0.000000e+00> : vector<8xf32>
    %17 = vector.multi_reduction <add>, %16, %cst_5 [1] : vector<8x32xf32> to vector<8xf32>
    %18 = vector.shape_cast %17 : vector<8xf32> to vector<8x1xf32>
    %19 = vector.extract_strided_slice %8 {offsets = [0, 0], sizes = [8, 32], strides = [1, 1]} : vector<8x128xf32> to vector<8x32xf32>
    %cst_6 = arith.constant dense<0.000000e+00> : vector<8xf32>
    %20 = vector.multi_reduction <add>, %19, %cst_6 [1] : vector<8x32xf32> to vector<8xf32>
    %21 = vector.shape_cast %20 : vector<8xf32> to vector<8x1xf32>
    %22 = math.sqrt %21 : vector<8x1xf32>
    %23 = math.sqrt %18 : vector<8x1xf32>
    %24 = arith.subf %22, %23 : vector<8x1xf32>
    %cst_7 = arith.constant 1.000000e+00 : f32
    %25 = vector.broadcast %cst_7 : f32 to vector<8x1xf32>
    %26 = arith.addf %24, %25 : vector<8x1xf32>
    %cst_8 = arith.constant 0.000000e+00 : f32
    %27 = vector.broadcast %cst_8 : f32 to vector<8x1xf32>
    %28 = arith.maximumf %26, %27 : vector<8x1xf32>
    %c0_i32 = arith.constant 0 : i32
    %29 = vector.broadcast %c0_i32 : i32 to vector<8x1xi32>
    %30 = arith.addi %14, %29 : vector<8x1xi32>
    %c48_i32 = arith.constant 48 : i32
    %31 = vector.broadcast %c48_i32 : i32 to vector<8x1xi32>
    %32 = arith.cmpi slt, %30, %31 : vector<8x1xi32>
    %cst_9 = arith.constant 0.000000e+00 : f32
    %33 = vector.broadcast %cst_9 : f32 to vector<8x1xf32>
    %34 = arith.select %32, %28, %33 : vector<8x1xi1>, vector<8x1xf32>
    %35 = arith.addf %15, %34 : vector<8x1xf32>
    %36 = vector.extract_strided_slice %5 {offsets = [0, 32], sizes = [8, 32], strides = [1, 1]} : vector<8x128xf32> to vector<8x32xf32>
    %cst_10 = arith.constant dense<0.000000e+00> : vector<8xf32>
    %37 = vector.multi_reduction <add>, %36, %cst_10 [1] : vector<8x32xf32> to vector<8xf32>
    %38 = vector.shape_cast %37 : vector<8xf32> to vector<8x1xf32>
    %39 = vector.extract_strided_slice %8 {offsets = [0, 32], sizes = [8, 32], strides = [1, 1]} : vector<8x128xf32> to vector<8x32xf32>
    %cst_11 = arith.constant dense<0.000000e+00> : vector<8xf32>
    %40 = vector.multi_reduction <add>, %39, %cst_11 [1] : vector<8x32xf32> to vector<8xf32>
    %41 = vector.shape_cast %40 : vector<8xf32> to vector<8x1xf32>
    %42 = math.sqrt %41 : vector<8x1xf32>
    %43 = math.sqrt %38 : vector<8x1xf32>
    %44 = arith.subf %42, %43 : vector<8x1xf32>
    %cst_12 = arith.constant 1.000000e+00 : f32
    %45 = vector.broadcast %cst_12 : f32 to vector<8x1xf32>
    %46 = arith.addf %44, %45 : vector<8x1xf32>
    %cst_13 = arith.constant 0.000000e+00 : f32
    %47 = vector.broadcast %cst_13 : f32 to vector<8x1xf32>
    %48 = arith.maximumf %46, %47 : vector<8x1xf32>
    %c1_i32 = arith.constant 1 : i32
    %49 = vector.broadcast %c1_i32 : i32 to vector<8x1xi32>
    %50 = arith.addi %14, %49 : vector<8x1xi32>
    %c48_i32_14 = arith.constant 48 : i32
    %51 = vector.broadcast %c48_i32_14 : i32 to vector<8x1xi32>
    %52 = arith.cmpi slt, %50, %51 : vector<8x1xi32>
    %cst_15 = arith.constant 0.000000e+00 : f32
    %53 = vector.broadcast %cst_15 : f32 to vector<8x1xf32>
    %54 = arith.select %52, %48, %53 : vector<8x1xi1>, vector<8x1xf32>
    %55 = arith.addf %35, %54 : vector<8x1xf32>
    %56 = vector.extract_strided_slice %5 {offsets = [0, 64], sizes = [8, 32], strides = [1, 1]} : vector<8x128xf32> to vector<8x32xf32>
    %cst_16 = arith.constant dense<0.000000e+00> : vector<8xf32>
    %57 = vector.multi_reduction <add>, %56, %cst_16 [1] : vector<8x32xf32> to vector<8xf32>
    %58 = vector.shape_cast %57 : vector<8xf32> to vector<8x1xf32>
    %59 = vector.extract_strided_slice %8 {offsets = [0, 64], sizes = [8, 32], strides = [1, 1]} : vector<8x128xf32> to vector<8x32xf32>
    %cst_17 = arith.constant dense<0.000000e+00> : vector<8xf32>
    %60 = vector.multi_reduction <add>, %59, %cst_17 [1] : vector<8x32xf32> to vector<8xf32>
    %61 = vector.shape_cast %60 : vector<8xf32> to vector<8x1xf32>
    %62 = math.sqrt %61 : vector<8x1xf32>
    %63 = math.sqrt %58 : vector<8x1xf32>
    %64 = arith.subf %62, %63 : vector<8x1xf32>
    %cst_18 = arith.constant 1.000000e+00 : f32
    %65 = vector.broadcast %cst_18 : f32 to vector<8x1xf32>
    %66 = arith.addf %64, %65 : vector<8x1xf32>
    %cst_19 = arith.constant 0.000000e+00 : f32
    %67 = vector.broadcast %cst_19 : f32 to vector<8x1xf32>
    %68 = arith.maximumf %66, %67 : vector<8x1xf32>
    %c2_i32 = arith.constant 2 : i32
    %69 = vector.broadcast %c2_i32 : i32 to vector<8x1xi32>
    %70 = arith.addi %14, %69 : vector<8x1xi32>
    %c48_i32_20 = arith.constant 48 : i32
    %71 = vector.broadcast %c48_i32_20 : i32 to vector<8x1xi32>
    %72 = arith.cmpi slt, %70, %71 : vector<8x1xi32>
    %cst_21 = arith.constant 0.000000e+00 : f32
    %73 = vector.broadcast %cst_21 : f32 to vector<8x1xf32>
    %74 = arith.select %72, %68, %73 : vector<8x1xi1>, vector<8x1xf32>
    %75 = arith.addf %55, %74 : vector<8x1xf32>
    %76 = vector.extract_strided_slice %5 {offsets = [0, 96], sizes = [8, 32], strides = [1, 1]} : vector<8x128xf32> to vector<8x32xf32>
    %cst_22 = arith.constant dense<0.000000e+00> : vector<8xf32>
    %77 = vector.multi_reduction <add>, %76, %cst_22 [1] : vector<8x32xf32> to vector<8xf32>
    %78 = vector.shape_cast %77 : vector<8xf32> to vector<8x1xf32>
    %79 = vector.extract_strided_slice %8 {offsets = [0, 96], sizes = [8, 32], strides = [1, 1]} : vector<8x128xf32> to vector<8x32xf32>
    %cst_23 = arith.constant dense<0.000000e+00> : vector<8xf32>
    %80 = vector.multi_reduction <add>, %79, %cst_23 [1] : vector<8x32xf32> to vector<8xf32>
    %81 = vector.shape_cast %80 : vector<8xf32> to vector<8x1xf32>
    %82 = math.sqrt %81 : vector<8x1xf32>
    %83 = math.sqrt %78 : vector<8x1xf32>
    %84 = arith.subf %82, %83 : vector<8x1xf32>
    %cst_24 = arith.constant 1.000000e+00 : f32
    %85 = vector.broadcast %cst_24 : f32 to vector<8x1xf32>
    %86 = arith.addf %84, %85 : vector<8x1xf32>
    %cst_25 = arith.constant 0.000000e+00 : f32
    %87 = vector.broadcast %cst_25 : f32 to vector<8x1xf32>
    %88 = arith.maximumf %86, %87 : vector<8x1xf32>
    %c3_i32 = arith.constant 3 : i32
    %89 = vector.broadcast %c3_i32 : i32 to vector<8x1xi32>
    %90 = arith.addi %14, %89 : vector<8x1xi32>
    %c48_i32_26 = arith.constant 48 : i32
    %91 = vector.broadcast %c48_i32_26 : i32 to vector<8x1xi32>
    %92 = arith.cmpi slt, %90, %91 : vector<8x1xi32>
    %cst_27 = arith.constant 0.000000e+00 : f32
    %93 = vector.broadcast %cst_27 : f32 to vector<8x1xf32>
    %94 = arith.select %92, %88, %93 : vector<8x1xi1>, vector<8x1xf32>
    %95 = arith.addf %75, %94 : vector<8x1xf32>
    %96 = vector.shape_cast %95 : vector<8x1xf32> to vector<1x8x1xf32>
    %cst_28 = arith.constant dense<0.000000e+00> : vector<1xf32>
    %97 = vector.multi_reduction <add>, %96, %cst_28 [1, 2] : vector<1x8x1xf32> to vector<1xf32>
    %98 = vector.shape_cast %97 : vector<1xf32> to vector<1x1x1xf32>
    %99 = vector.extract %98[0, 0, 0] : f32 from vector<1x1x1xf32>
    %100 = vector.broadcast %99 : f32 to vector<1x8x128xf32>
    %c0_29 = arith.constant 0 : index
    %c0_30 = arith.constant 0 : index
    %c0_31 = arith.constant 0 : index
    %101 = vector.load %arg4[%c0_29, %c0_30, %c0_31] : memref<1x8x128xf32, #tpu.memory_space<vmem>>, vector<1x8x128xf32>
    tpu.vector_store %arg4[%c0_29, %c0_30, %c0_31], %100 {strides = array<i32>} : memref<1x8x128xf32, #tpu.memory_space<vmem>>, vector<1x8x128xf32>,
    return
  }
  func.func @transform_0(%arg0: i32) -> (i32, i32) {
    %c0_i32 = arith.constant 0 : i32
    %c0_i32_0 = arith.constant 0 : i32
    return %arg0, %c0_i32 : i32, i32
  }
  func.func @transform_1(%arg0: i32) -> (i32, i32) {
    %c0_i32 = arith.constant 0 : i32
    %c0_i32_0 = arith.constant 0 : i32
    return %arg0, %c0_i32 : i32, i32
  }
  func.func @transform_2(%arg0: i32) -> (i32, i32) {
    %c0_i32 = arith.constant 0 : i32
    %c0_i32_0 = arith.constant 0 : i32
    return %arg0, %c0_i32 : i32, i32
  }
  func.func @transform_3(%arg0: i32) -> (i32, i32, i32) {
    %c0_i32 = arith.constant 0 : i32
    %c0_i32_0 = arith.constant 0 : i32
    %c0_i32_1 = arith.constant 0 : i32
    return %arg0, %c0_i32, %c0_i32_0 : i32, i32, i32
  }
}

</mosaic_0001>

<llo_original>
// kernel: tpu_custom_call.1
$region0: #{tpu_custom_call.1}
  #allocation0 [shape = 'u32[]', space=smem, size = 0x4, offset = 0x4, fixed_abs, tag = 'smem constant byte address 0x4 - core index']
  #allocation1 [shape = 'u32[144,128]{1,0:T(1,128)}', space=vmem, size = 0x12000, scoped, tag = 'internal scratch']
  %s0 = inlined_call_operand.hbm [shape: f32[12,128], index: 0, kind: input, shape index: {}]
  %s1 = inlined_call_operand.hbm [shape: f32[12,128], index: 1, kind: input, shape index: {}]
  %s2 = inlined_call_operand.hbm [shape: f32[12,128], index: 2, kind: input, shape index: {}]
  %s3 = inlined_call_operand.hbm [shape: f32[2,8,128], index: 3, kind: output, shape index: {}]
  %s4 = sld [smem:[#allocation0]]
  $region57: #{tpu_custom_call.1} parent=0
    _
  %s6 = ssub.s32 1, %s4
  %s7 = scalar_select 0, %s6, %s4
  $region1: #{tpu_custom_call.1} parent=0
    #allocation2 [shape = 'u8[8192]{0}', space=vmem, size = 0x2000, scoped, tag = 'input window, operand 0']
    #allocation3 [shape = 's32[2]{0}', space=sflag, size = 0x8, scoped, tag = 'scoped memory for tpu_custom_call.1']
    #allocation4 [shape = 's32[2]{0}', space=sflag, size = 0x8, scoped, tag = 'scoped memory for tpu_custom_call.1']
    #allocation5 [shape = 'u8[8192]{0}', space=vmem, size = 0x2000, scoped, tag = 'input window, operand 1']
    #allocation6 [shape = 's32[2]{0}', space=sflag, size = 0x8, scoped, tag = 'scoped memory for tpu_custom_call.1']
    #allocation7 [shape = 'u8[8192]{0}', space=vmem, size = 0x2000, scoped, tag = 'input window, operand 2']
    #allocation8 [shape = 'u8[8192]{0}', space=vmem, size = 0x2000, scoped, tag = 'output window, operand 0']
    %8 = vsyncpa [#allocation3], 0
    %s9 = scalar_lea.sflag [#allocation3], 1
    %10 = vsyncpa %s9, 0
    %11 = vsyncpa [#allocation6], 0
    %s12 = scalar_lea.sflag [#allocation6], 1
    %13 = vsyncpa %s12, 0
    %14 = vsyncpa [#allocation4], 0
    %s15 = scalar_lea.sflag [#allocation4], 1
    %16 = vsyncpa %s15, 0
    loop: start=0, step=1, limit=4
    $region2: #{tpu_custom_call.1} parent=1 // loop_pre_header
      _
    $region3: #{tpu_custom_call.1} parent=1 // loop_header
      %s18 = sphi 0, %s22
      %p19 = scmp.ge.s32.totalorder %s18, 4
      %s28 = sphi 0, %s30
      %s31 = sphi 0, %s28
      %s32 = sphi 0, %s31
      %s48 = sphi 0, %s32
      %s54 = sphi 0, %s56
      %s57 = sphi 0, %s54
      %s58 = sphi 0, %s57
      %s74 = sphi 0, %s58
      %s80 = sphi 0, %s82
      %s83 = sphi 0, %s80
      %s84 = sphi 0, %s83
      %s100 = sphi 0, %s84
      %s106 = sphi 0, %s108
      %s109 = sphi 0, %s106
      %s110 = sphi 0, %s109
      %s126 = sphi 0, %s110
    $region4: #{tpu_custom_call.1} parent=1 // loop_header_branch
      %21 = sbr.rel (%p19) target = $region8
    $region5: #{tpu_custom_call.1} parent=1 // loop_body
      %s23 = ssub.s32 %s18, 1
      %s24 = ssub.s32 %s18, 2
      %s25 = sadd.s32 %s18, 1
      %s26 = ssub.s32 %s18, %s25
      %p27 = scmp.eq.s32.totalorder %s26, 0
      %s29 = sadd.s32 %s28, 1
      %s30 = scalar_select %p27, %s28, %s29
      %p33 = pneg %p27
      %p34 = scmp.eq.s32.totalorder %s18, 1
      %p35 = por %p33, %p34
      %p36 = scmp.ne.s32.totalorder %s28, %s31
      %p37 = scmp.eq.s32.totalorder %s18, 0
      %p38 = por %p36, %p37
      %p39 = scmp.ne.s32.totalorder %s28, %s31
      %p40 = scmp.eq.s32.totalorder %s23, 1
      %p41 = por %p39, %p40
      %p42 = scmp.ne.s32.totalorder %s31, %s32
      %p43 = scmp.eq.s32.totalorder %s23, 0
      %p44 = por %p42, %p43
      %p45 = scmp.ne.s32.totalorder %s31, %s32
      %p46 = scmp.eq.s32.totalorder %s24, 1
      %p47 = por %p45, %p46
      %p49 = scmp.ne.s32.totalorder %s32, %s48
      %p50 = scmp.eq.s32.totalorder %s24, 0
      %p51 = por %p49, %p50
      %s52 = ssub.s32 %s18, %s25
      %p53 = scmp.eq.s32.totalorder %s52, 0
      %s55 = sadd.s32 %s54, 1
      %s56 = scalar_select %p53, %s54, %s55
      %p59 = pneg %p53
      %p60 = scmp.eq.s32.totalorder %s18, 1
      %p61 = por %p59, %p60
      %p62 = scmp.ne.s32.totalorder %s54, %s57
      %p63 = scmp.eq.s32.totalorder %s18, 0
      %p64 = por %p62, %p63
      %p65 = scmp.ne.s32.totalorder %s54, %s57
      %p66 = scmp.eq.s32.totalorder %s23, 1
      %p67 = por %p65, %p66
      %p68 = scmp.ne.s32.totalorder %s57, %s58
      %p69 = scmp.eq.s32.totalorder %s23, 0
      %p70 = por %p68, %p69
      %p71 = scmp.ne.s32.totalorder %s57, %s58
      %p72 = scmp.eq.s32.totalorder %s24, 1
      %p73 = por %p71, %p72
      %p75 = scmp.ne.s32.totalorder %s58, %s74
      %p76 = scmp.eq.s32.totalorder %s24, 0
      %p77 = por %p75, %p76
      %s78 = ssub.s32 %s18, %s25
      %p79 = scmp.eq.s32.totalorder %s78, 0
      %s81 = sadd.s32 %s80, 1
      %s82 = scalar_select %p79, %s80, %s81
      %p85 = pneg %p79
      %p86 = scmp.eq.s32.totalorder %s18, 1
      %p87 = por %p85, %p86
      %p88 = scmp.ne.s32.totalorder %s80, %s83
      %p89 = scmp.eq.s32.totalorder %s18, 0
      %p90 = por %p88, %p89
      %p91 = scmp.ne.s32.totalorder %s80, %s83
      %p92 = scmp.eq.s32.totalorder %s23, 1
      %p93 = por %p91, %p92
      %p94 = scmp.ne.s32.totalorder %s83, %s84
      %p95 = scmp.eq.s32.totalorder %s23, 0
      %p96 = por %p94, %p95
      %p97 = scmp.ne.s32.totalorder %s83, %s84
      %p98 = scmp.eq.s32.totalorder %s24, 1
      %p99 = por %p97, %p98
      %p101 = scmp.ne.s32.totalorder %s84, %s100
      %p102 = scmp.eq.s32.totalorder %s24, 0
      %p103 = por %p101, %p102
      %s104 = ssub.s32 %s18, %s25
      %p105 = scmp.eq.s32.totalorder %s104, 0
      %s107 = sadd.s32 %s106, 1
      %s108 = scalar_select %p105, %s106, %s107
      %p111 = pneg %p105
      %p112 = scmp.eq.s32.totalorder %s18, 1
      %p113 = por %p111, %p112
      %p114 = scmp.ne.s32.totalorder %s106, %s109
      %p115 = scmp.eq.s32.totalorder %s18, 0
      %p116 = por %p114, %p115
      %p117 = scmp.ne.s32.totalorder %s106, %s109
      %p118 = scmp.eq.s32.totalorder %s23, 1
      %p119 = por %p117, %p118
      %p120 = scmp.ne.s32.totalorder %s109, %s110
      %p121 = scmp.eq.s32.totalorder %s23, 0
      %p122 = por %p120, %p121
      %p123 = scmp.ne.s32.totalorder %s109, %s110
      %p124 = scmp.eq.s32.totalorder %s24, 1
      %p125 = por %p123, %p124
      %p127 = scmp.ne.s32.totalorder %s110, %s126
      %p128 = scmp.eq.s32.totalorder %s24, 0
      %p129 = por %p127, %p128
      %p130 = scmp.le.s32.totalorder 1, %s18
      %p131 = scmp.lt.s32.totalorder %s18, 3
      %p132 = pnand %p130, %p131
      %p133 = pneg %p132
      // Predicated region
      $region9: #{tpu_custom_call.1} parent=5 // pred_check
        _
      $region10: #{tpu_custom_call.1} parent=5 // pred_check_branch
        %135 = sbr.rel (%p132) target = $region12
      $region11: #{tpu_custom_call.1} parent=5 // pred_region
        %s136 = ssub.s32 %s18, 1
      $region12: #{tpu_custom_call.1} parent=5 // pred_fallthru
        _
      %p137 = scmp.lt.s32.totalorder %s18, 2
      // Predicated region
      $region13: #{tpu_custom_call.1} parent=5 // pred_check
        %p138 = pneg %p137
      $region14: #{tpu_custom_call.1} parent=5 // pred_check_branch
        %140 = sbr.rel (%p138) target = $region16
      $region15: #{tpu_custom_call.1} parent=5 // pred_region
        // Predicated region
        $region17: #{tpu_custom_call.1} parent=15 // pred_check
          %p141 = pneg %p38
        $region18: #{tpu_custom_call.1} parent=15 // pred_check_branch
          %143 = sbr.rel (%p141) target = $region20
        $region19: #{tpu_custom_call.1} parent=15 // pred_region
          %s144 = sand.u32 %s28, 1
          %s145 = scalar_lea.sflag [#allocation3], %s144
          %s146 = sand.u32 %s28, 1
          %s147 = smul.addr %s146, 8
          %s148 = scalar_lea.vmem [#allocation2], %s147
          %s150 = ssub.s32 128, 128
          %151 = vsyncadd %s145, %s150
          %s152 = smul.addr %s18, 128
          %s153 = scalar_lea.hbm %s0, %s152
          %s155 = sshll.u32 %s148, 4
          %s156 = int_to_ptr.vmem [resolvable:$true] %s155
          %158 = dma.hbm_to_vmem [thread:$0]  %s153, 128, %s156, %s145
        $region20: #{tpu_custom_call.1} parent=15 // pred_fallthru
          _
        // Predicated region
        $region21: #{tpu_custom_call.1} parent=15 // pred_check
          %p159 = pneg %p64
        $region22: #{tpu_custom_call.1} parent=15 // pred_check_branch
          %161 = sbr.rel (%p159) target = $region24
        $region23: #{tpu_custom_call.1} parent=15 // pred_region
          %s162 = sand.u32 %s18, 1
          %s163 = scalar_lea.sflag [#allocation6], %s162
          %s164 = sand.u32 %s54, 1
          %s165 = smul.addr %s164, 8
          %s166 = scalar_lea.vmem [#allocation5], %s165
          %s168 = ssub.s32 128, 128
          %169 = vsyncadd %s163, %s168
          %s170 = smul.addr %s18, 128
          %s171 = scalar_lea.hbm %s1, %s170
          %s173 = sshll.u32 %s166, 4
          %s174 = int_to_ptr.vmem [resolvable:$true] %s173
          %176 = dma.hbm_to_vmem [thread:$0]  %s171, 128, %s174, %s163
        $region24: #{tpu_custom_call.1} parent=15 // pred_fallthru
          _
        // Predicated region
        $region25: #{tpu_custom_call.1} parent=15 // pred_check
          %p177 = pneg %p90
        $region26: #{tpu_custom_call.1} parent=15 // pred_check_branch
          %179 = sbr.rel (%p177) target = $region28
        $region27: #{tpu_custom_call.1} parent=15 // pred_region
          %s180 = sand.u32 %s18, 1
          %s181 = scalar_lea.sflag [#allocation6], %s180
          %s182 = sand.u32 %s80, 1
          %s183 = smul.addr %s182, 8
          %s184 = scalar_lea.vmem [#allocation7], %s183
          %s186 = ssub.s32 128, 128
          %187 = vsyncadd %s181, %s186
          %s188 = smul.addr %s18, 128
          %s189 = scalar_lea.hbm %s2, %s188
          %s191 = sshll.u32 %s184, 4
          %s192 = int_to_ptr.vmem [resolvable:$true] %s191
          %194 = dma.hbm_to_vmem [thread:$0]  %s189, 128, %s192, %s181
        $region28: #{tpu_custom_call.1} parent=15 // pred_fallthru
          _
      $region16: #{tpu_custom_call.1} parent=5 // pred_fallthru
        _
      %p195 = scmp.le.s32.totalorder 1, %s18
      %p196 = scmp.lt.s32.totalorder %s18, 3
      %p197 = pnand %p195, %p196
      %p198 = pneg %p197
      // Predicated region
      $region29: #{tpu_custom_call.1} parent=5 // pred_check
        _
      $region30: #{tpu_custom_call.1} parent=5 // pred_check_branch
        %200 = sbr.rel (%p197) target = $region32
      $region31: #{tpu_custom_call.1} parent=5 // pred_region
        %s201 = ssub.s32 %s18, 1
        %s202 = sand.u32 %s31, 1
        %s203 = scalar_lea.sflag [#allocation3], %s202
        %s204 = sand.u32 %s31, 1
        %s205 = smul.addr %s204, 8
        %s206 = scalar_lea.vmem [#allocation2], %s205
        // Predicated region
        $region33: #{tpu_custom_call.1} parent=31 // pred_check
          %p207 = pneg %p44
        $region34: #{tpu_custom_call.1} parent=31 // pred_check_branch
          %209 = sbr.rel (%p207) target = $region36
        $region35: #{tpu_custom_call.1} parent=31 // pred_region
          %210 = dma.done %s203, 128
        $region36: #{tpu_custom_call.1} parent=31 // pred_fallthru
          _
        %s211 = sand.u32 %s23, 1
        %s212 = scalar_lea.sflag [#allocation6], %s211
        %s213 = sand.u32 %s57, 1
        %s214 = smul.addr %s213, 8
        %s215 = scalar_lea.vmem [#allocation5], %s214
        // Predicated region
        $region37: #{tpu_custom_call.1} parent=31 // pred_check
          %p216 = pneg %p70
        $region38: #{tpu_custom_call.1} parent=31 // pred_check_branch
          %218 = sbr.rel (%p216) target = $region40
        $region39: #{tpu_custom_call.1} parent=31 // pred_region
          %219 = dma.done %s212, 128
        $region40: #{tpu_custom_call.1} parent=31 // pred_fallthru
          _
        %s220 = sand.u32 %s23, 1
        %s221 = scalar_lea.sflag [#allocation6], %s220
        %s222 = sand.u32 %s83, 1
        %s223 = smul.addr %s222, 8
        %s224 = scalar_lea.vmem [#allocation7], %s223
        // Predicated region
        $region41: #{tpu_custom_call.1} parent=31 // pred_check
          %p225 = pneg %p96
        $region42: #{tpu_custom_call.1} parent=31 // pred_check_branch
          %227 = sbr.rel (%p225) target = $region44
        $region43: #{tpu_custom_call.1} parent=31 // pred_region
          %228 = dma.done %s221, 128
        $region44: #{tpu_custom_call.1} parent=31 // pred_fallthru
          _
        %s229 = sand.u32 %s31, 1
        %s230 = scalar_lea.sflag [#allocation3], %s229
        %s231 = sand.u32 %s31, 1
        %s232 = smul.addr %s231, 8
        %s233 = scalar_lea.vmem [#allocation2], %s232
        %p234 = pneg %p44
        %p235 = pneg %p41
        %s236 = sand.u32 %s23, 1
        %s237 = scalar_lea.sflag [#allocation6], %s236
        %s238 = sand.u32 %s57, 1
        %s239 = smul.addr %s238, 8
        %s240 = scalar_lea.vmem [#allocation5], %s239
        %p241 = pneg %p70
        %p242 = pneg %p67
        %s243 = sand.u32 %s23, 1
        %s244 = scalar_lea.sflag [#allocation6], %s243
        %s245 = sand.u32 %s83, 1
        %s246 = smul.addr %s245, 8
        %s247 = scalar_lea.vmem [#allocation7], %s246
        %p248 = pneg %p96
        %p249 = pneg %p93
        %p250 = pneg %p122
        %p251 = pneg %p119
        %s252 = sand.u32 %s109, 1
        %s253 = scalar_lea.sflag [#allocation4], %s252
        %s254 = sand.u32 %s109, 1
        %s255 = smul.addr %s254, 8
        %s256 = scalar_lea.vmem [#allocation8], %s255
        %v257 = vld [vmem:[%s206] sm:$0xff]
        %v258 = vld [vmem:[%s215] sm:$0xff]
        %v259 = vld [vmem:[%s224] sm:$0xff]
        %v260 = vsub.f32 %v257, %v258
        %v261 = vmul.f32 %v260, %v260
        %v262 = vsub.f32 %v257, %v259
        %v263 = vmul.f32 %v262, %v262
        %v264 = vlaneseq
        %v265 = vshrl.u32 %v264, 7
        %s266 = smul.u32 %s23, 8
        %v267 = vstv %s266
        %v268 = vadd.s32 %v267, %v265
        %v269 = vmul.u32 %v268, 4
        %vm270 = vcmask 261120
        %v271 = vsel %vm270, %v261, 0.0
        %272 = vadd.xlane.f32.xlu0 %v271
        %v273 = vpop.xlane.xlu0 %272
        %v274 = vsel %vm270, %v263, 0.0
        %275 = vadd.xlane.f32.xlu0 %v274
        %v276 = vpop.xlane.xlu0 %275
        %v277 = vrsqrt.pop %v276
        %v278 = vmul.f32 %v276, %v277
        %vm279 = vcmp.eq.f32.partialorder %v276, inf
        %v280 = vsel %vm279, %v276, %v278
        %vm281 = vcmp.eq.f32.partialorder %v276, 0.0
        %v282 = vand.u32 %v276, 2147483648
        %v283 = vsel %vm281, %v282, %v280
        %v284 = vrsqrt.pop %v273
        %v285 = vmul.f32 %v273, %v284
        %vm286 = vcmp.eq.f32.partialorder %v273, inf
        %v287 = vsel %vm286, %v273, %v285
        %vm288 = vcmp.eq.f32.partialorder %v273, 0.0
        %v289 = vand.u32 %v273, 2147483648
        %v290 = vsel %vm288, %v289, %v287
        %v291 = vsub.f32 %v283, %v290
        %v292 = vadd.f32 %v291, 1.0
        %v293 = vmax.f32 %v292, 0.0
        %vm294 = vcmp.lt.s32.totalorder %v269, 48
        %v295 = vsel %vm294, %v293, 0.0
        %v296 = vadd.f32 %v295, 0.0
        %298 = vrot.lane.b32.xlu0 %v261, 96
        %v299 = vpop.permute.xlu0 %298
        %v301 = vsel %vm270, %v299, 0.0
        %302 = vadd.xlane.f32.xlu0 %v301
        %v303 = vpop.xlane.xlu0 %302
        %305 = vrot.lane.b32.xlu0 %v263, 96
        %v306 = vpop.permute.xlu0 %305
        %v308 = vsel %vm270, %v306, 0.0
        %309 = vadd.xlane.f32.xlu0 %v308
        %v310 = vpop.xlane.xlu0 %309
        %v311 = vrsqrt.pop %v310
        %v312 = vmul.f32 %v310, %v311
        %vm313 = vcmp.eq.f32.partialorder %v310, inf
        %v314 = vsel %vm313, %v310, %v312
        %vm315 = vcmp.eq.f32.partialorder %v310, 0.0
        %v316 = vand.u32 %v310, 2147483648
        %v317 = vsel %vm315, %v316, %v314
        %v318 = vrsqrt.pop %v303
        %v319 = vmul.f32 %v303, %v318
        %vm320 = vcmp.eq.f32.partialorder %v303, inf
        %v321 = vsel %vm320, %v303, %v319
        %vm322 = vcmp.eq.f32.partialorder %v303, 0.0
        %v323 = vand.u32 %v303, 2147483648
        %v324 = vsel %vm322, %v323, %v321
        %v325 = vsub.f32 %v317, %v324
        %v326 = vadd.f32 %v325, 1.0
        %v327 = vmax.f32 %v326, 0.0
        %v328 = vadd.s32 %v269, 1
        %vm329 = vcmp.lt.s32.totalorder %v328, 48
        %v330 = vsel %vm329, %v327, 0.0
        %v331 = vadd.f32 %v296, %v330
        %332 = vrot.lane.b32.xlu0 %v261, 64
        %v333 = vpop.permute.xlu0 %332
        %v335 = vsel %vm270, %v333, 0.0
        %336 = vadd.xlane.f32.xlu0 %v335
        %v337 = vpop.xlane.xlu0 %336
        %338 = vrot.lane.b32.xlu0 %v263, 64
        %v339 = vpop.permute.xlu0 %338
        %v341 = vsel %vm270, %v339, 0.0
        %342 = vadd.xlane.f32.xlu0 %v341
        %v343 = vpop.xlane.xlu0 %342
        %v344 = vrsqrt.pop %v343
        %v345 = vmul.f32 %v343, %v344
        %vm346 = vcmp.eq.f32.partialorder %v343, inf
        %v347 = vsel %vm346, %v343, %v345
        %vm348 = vcmp.eq.f32.partialorder %v343, 0.0
        %v349 = vand.u32 %v343, 2147483648
        %v350 = vsel %vm348, %v349, %v347
        %v351 = vrsqrt.pop %v337
        %v352 = vmul.f32 %v337, %v351
        %vm353 = vcmp.eq.f32.partialorder %v337, inf
        %v354 = vsel %vm353, %v337, %v352
        %vm355 = vcmp.eq.f32.partialorder %v337, 0.0
        %v356 = vand.u32 %v337, 2147483648
        %v357 = vsel %vm355, %v356, %v354
        %v358 = vsub.f32 %v350, %v357
        %v359 = vadd.f32 %v358, 1.0
        %v360 = vmax.f32 %v359, 0.0
        %v361 = vadd.s32 %v269, 2
        %vm362 = vcmp.lt.s32.totalorder %v361, 48
        %v363 = vsel %vm362, %v360, 0.0
        %v364 = vadd.f32 %v331, %v363
        %365 = vrot.lane.b32.xlu0 %v261, 32
        %v366 = vpop.permute.xlu0 %365
        %v368 = vsel %vm270, %v366, 0.0
        %369 = vadd.xlane.f32.xlu0 %v368
        %v370 = vpop.xlane.xlu0 %369
        %371 = vrot.lane.b32.xlu0 %v263, 32
        %v372 = vpop.permute.xlu0 %371
        %v374 = vsel %vm270, %v372, 0.0
        %375 = vadd.xlane.f32.xlu0 %v374
        %v376 = vpop.xlane.xlu0 %375
        %v377 = vrsqrt.pop %v376
        %v378 = vmul.f32 %v376, %v377
        %vm379 = vcmp.eq.f32.partialorder %v376, inf
        %v380 = vsel %vm379, %v376, %v378
        %vm381 = vcmp.eq.f32.partialorder %v376, 0.0
        %v382 = vand.u32 %v376, 2147483648
        %v383 = vsel %vm381, %v382, %v380
        %v384 = vrsqrt.pop %v370
        %v385 = vmul.f32 %v370, %v384
        %vm386 = vcmp.eq.f32.partialorder %v370, inf
        %v387 = vsel %vm386, %v370, %v385
        %vm388 = vcmp.eq.f32.partialorder %v370, 0.0
        %v389 = vand.u32 %v370, 2147483648
        %v390 = vsel %vm388, %v389, %v387
        %v391 = vsub.f32 %v383, %v390
        %v392 = vadd.f32 %v391, 1.0
        %v393 = vmax.f32 %v392, 0.0
        %v394 = vadd.s32 %v269, 3
        %vm395 = vcmp.lt.s32.totalorder %v394, 48
        %v396 = vsel %vm395, %v393, 0.0
        %v397 = vadd.f32 %v364, %v396
        %vm398 = vcmask 7168
        %v399 = vsel %vm398, %v397, 0.0
        %400 = vadd.xlane.f32.xlu0 %v399
        %v401 = vpop.xlane.xlu0 %400
        %v402 = vrot.slane %v401, 4
        %v403 = vadd.f32 %v401, %v402
        %v404 = vrot.slane %v403, 2
        %v405 = vadd.f32 %v403, %v404
        %v406 = vrot.slane %v405, 1
        %v407 = vadd.f32 %v405, %v406
        %s408 = vtos %v407
        %v409 = vstv %s408
        %410 = vst [vmem:[%s256] sm:$0xff] %v409
        %s411 = sand.u32 %s109, 1
        %s412 = scalar_lea.sflag [#allocation4], %s411
        %s413 = sand.u32 %s109, 1
        %s414 = smul.addr %s413, 8
        %s415 = scalar_lea.vmem [#allocation8], %s414
        // Predicated region
        $region45: #{tpu_custom_call.1} parent=31 // pred_check
          %p416 = pneg %p119
        $region46: #{tpu_custom_call.1} parent=31 // pred_check_branch
          %418 = sbr.rel (%p416) target = $region48
        $region47: #{tpu_custom_call.1} parent=31 // pred_region
          %s420 = ssub.s32 128, 128
          %421 = vsyncadd %s412, %s420
          %s422 = smul.addr %s23, 128
          %s423 = scalar_lea.hbm %s3, %s422
          %s425 = sshll.u32 %s415, 4
          %s426 = int_to_ptr.vmem [resolvable:$true] %s425
          %428 = dma.vmem_to_hbm [thread:$0]  %s426, 128, %s423, %s412
        $region48: #{tpu_custom_call.1} parent=31 // pred_fallthru
          _
      $region32: #{tpu_custom_call.1} parent=5 // pred_fallthru
        _
      %p429 = scmp.le.s32.totalorder 2, %s18
      // Predicated region
      $region49: #{tpu_custom_call.1} parent=5 // pred_check
        %p430 = pneg %p429
      $region50: #{tpu_custom_call.1} parent=5 // pred_check_branch
        %432 = sbr.rel (%p430) target = $region52
      $region51: #{tpu_custom_call.1} parent=5 // pred_region
        %s433 = ssub.s32 %s18, 2
        // Predicated region
        $region53: #{tpu_custom_call.1} parent=51 // pred_check
          %p434 = pneg %p125
        $region54: #{tpu_custom_call.1} parent=51 // pred_check_branch
          %436 = sbr.rel (%p434) target = $region56
        $region55: #{tpu_custom_call.1} parent=51 // pred_region
          %s437 = sand.u32 %s110, 1
          %s438 = scalar_lea.sflag [#allocation4], %s437
          %s439 = sand.u32 %s110, 1
          %s440 = smul.addr %s439, 8
          %s441 = scalar_lea.vmem [#allocation8], %s440
          %442 = dma.done %s438, 128
        $region56: #{tpu_custom_call.1} parent=51 // pred_fallthru
          _
      $region52: #{tpu_custom_call.1} parent=5 // pred_fallthru
        _
    $region6: #{tpu_custom_call.1} parent=1 // loop_footer
      %s22 = sadd.s32 1, %s18
    $region7: #{tpu_custom_call.1} parent=1 // loop_footer_branch
      %17 = sbr.rel target = $region3
    $region8: #{tpu_custom_call.1} parent=1 // loop_exit
      _
    %443 = vsyncpa [#allocation3], 1
    %s444 = scalar_lea.sflag [#allocation3], 1
    %445 = vsyncpa %s444, 1
    %446 = vsyncpa [#allocation6], 1
    %s447 = scalar_lea.sflag [#allocation6], 1
    %448 = vsyncpa %s447, 1
    %449 = vsyncpa [#allocation4], 1
    %s450 = scalar_lea.sflag [#allocation4], 1
    %451 = vsyncpa %s450, 1

</llo_original>
